<compile_context>
chip_gen: v7x
topology: tpu7x:2x2x1
jax: 0.10.0
libtpu: 0.0.40
codegen_flags: <defaults>
</compile_context>

<pallas_src>
import functools

import jax
import jax.numpy as jnp
from jax.experimental import pallas as pl
from jax.experimental.pallas import tpu as pltpu


def _vmem_capacity_bytes():
    """Physical VMEM per TensorCore; conservative fallback (v7x = 64 MiB)."""
    try:
        cap = int(getattr(pltpu.get_tpu_info(), "vmem_capacity_bytes"))
        if cap > 0:
            return cap
    except Exception:
        pass
    return 64 * 1024 * 1024


def _focal_loss_kernel(*refs, gamma, n_total, tile_n, tiles_per_split, has_alpha):
    # refs (has_alpha=True):  logits (TILE_N, C), targets (TILE_N, 1) int32,
    #                         alpha_t (TILE_N, 1) f32, out (1,1) f32 SMEM,
    #                         acc (TILE_N, 1) f32 VMEM scratch
    # refs (has_alpha=False): logits, targets, out, acc
    if has_alpha:
        logits_ref, targets_ref, alpha_ref, out_ref, acc_ref = refs
    else:
        logits_ref, targets_ref, out_ref, acc_ref = refs
        alpha_ref = None

    p = pl.program_id(0)   # partial-sum / core index ("parallel")
    i = pl.program_id(1)   # tile index within this split ("arbitrary")

    @pl.when(i == 0)
    def _init():
        acc_ref[...] = jnp.zeros_like(acc_ref)

    logits = logits_ref[...].astype(jnp.float32)        # (TILE_N, C)
    tgt = targets_ref[...]                               # (TILE_N, 1) int32
    tn, c = logits.shape

    # Target-logit gather without materializing an f32 one-hot (saves a cast,
    # a multiply and a (TILE_N, C) f32 temporary per tile).
    class_ids = jax.lax.broadcasted_iota(jnp.int32, (tn, c), 1)
    tgt_logit = jnp.sum(jnp.where(class_ids == tgt, logits, 0.0),
                        axis=-1, keepdims=True)                              # (TILE_N, 1)

    # Numerically-stable cross entropy: ce = logsumexp(logits) - logits[target]
    m = jnp.max(logits, axis=-1, keepdims=True)                              # (TILE_N, 1)
    lse = m + jnp.log(jnp.sum(jnp.exp(logits - m), axis=-1, keepdims=True))  # (TILE_N, 1)
    ce = lse - tgt_logit                                                     # (TILE_N, 1)

    pt = jnp.exp(-ce)
    base = jnp.maximum(1.0 - pt, 0.0)                    # guard tiny negatives

    # (1 - pt)**gamma * ce : integer gamma -> gamma repeated VPU multiplies
    # starting from ce (no ones_like, no EUP pow, no log(0) hazard).
    g = float(gamma)
    if g == round(g) and 0.0 <= g <= 8.0:
        loss = ce
        for _ in range(int(round(g))):
            loss = loss * base
    else:
        loss = jnp.power(base, jnp.float32(g)) * ce      # general fallback

    if has_alpha:
        loss = alpha_ref[...].astype(jnp.float32) * loss  # alpha[targets] pre-gathered

    # Mask rows past the true batch size (partial last tile / clamped OOB tiles).
    # Keep this as a select (jnp.where): stale-VMEM NaN/Inf must not propagate.
    tile_idx = p * tiles_per_split + i
    row_ids = tile_idx * tile_n + jax.lax.broadcasted_iota(jnp.int32, (tn, 1), 0)
    loss = jnp.where(row_ids < n_total, loss, 0.0)

    # Vector accumulation every step; single cross-sublane reduce at the end.
    acc_ref[...] += loss

    @pl.when(i == tiles_per_split - 1)
    def _finalize():
        out_ref[0, 0] = jnp.sum(acc_ref[...])


def focal_loss(logits, targets, gamma=2.0, alpha=None, *, max_tile_n=None):
    """Mean focal loss over (N, C) logits and (N,) integer targets."""
    n, c = logits.shape
    targets_2d = targets.reshape(n, 1).astype(jnp.int32)
    has_alpha = alpha is not None

    bytes_per = jnp.dtype(logits.dtype).itemsize
    # Sublane packing is dtype-dependent: f32 -> 8 rows/vreg, bf16 -> 16, 8-bit -> 32.
    sub = {4: 8, 2: 16, 1: 32}.get(bytes_per, 8)

    vmem_phys = _vmem_capacity_bytes()
    tile_cap = 8192 if vmem_phys >= (96 << 20) else 4096   # bigger tiles on 128 MiB chips

    # ~4 MiB logits tile per pipeline buffer: the kernel is HBM-bound, so the
    # tile DMA must dominate the ~0.35 us fixed per-grid-step overhead.
    tile_n = (4 << 20) // max(1, c * bytes_per)
    tile_n = max(sub, min(tile_cap, (tile_n // sub) * sub))
    if max_tile_n is not None:                            # test hook: force multi-tile grids
        tile_n = max(sub, min(tile_n, (max_tile_n // sub) * sub))
    if n <= tile_n:
        tile_n = max(sub, ((n + sub - 1) // sub) * sub)   # small batch: one aligned tile

    num_tiles = pl.cdiv(n, tile_n)
    # 2 partial sums (one per v7x TensorCore); collapse to 1 for single-tile work.
    num_splits = 2 if num_tiles >= 2 else 1
    tiles_per_split = pl.cdiv(num_tiles, num_splits)
    grid = (num_splits, tiles_per_split)

    def row_map(p, i):
        # Clamp so fully out-of-range steps (odd num_tiles) never produce an
        # out-of-bounds block index; their rows are masked inside the kernel.
        return (jnp.minimum(p * tiles_per_split + i, num_tiles - 1), 0)

    in_specs = [
        pl.BlockSpec((tile_n, c), row_map),   # logits (native dtype through DMA)
        pl.BlockSpec((tile_n, 1), row_map),   # targets
    ]
    inputs = [logits, targets_2d]
    if has_alpha:
        # Gather per-row alpha in the wrapper (cheap XLA gather over N elements);
        # the kernel then only needs an (N, 1) column and a single multiply.
        alpha_t = jnp.asarray(alpha, jnp.float32)[targets].reshape(n, 1)
        in_specs.append(pl.BlockSpec((tile_n, 1), row_map))
        inputs.append(alpha_t)

    # Double-buffered VMEM working set.  The (TILE_N, 1) columns and the vector
    # accumulator are lane-padded to 128 in VMEM, so budget them at full width.
    lane = 128
    logits_buf = tile_n * c * bytes_per
    col_buf = tile_n * lane * 4
    n_cols = 2 if has_alpha else 1
    footprint = 2 * logits_buf + 2 * n_cols * col_buf + col_buf   # + accumulator
    vmem_limit = int(min(vmem_phys // 2, max(32 << 20, footprint + (8 << 20))))

    kernel = functools.partial(
        _focal_loss_kernel,
        gamma=gamma,
        n_total=n,
        tile_n=tile_n,
        tiles_per_split=tiles_per_split,
        has_alpha=has_alpha,
    )

    partials = pl.pallas_call(
        kernel,
        out_shape=jax.ShapeDtypeStruct((num_splits, 1), jnp.float32),
        grid=grid,
        in_specs=in_specs,
        out_specs=pl.BlockSpec((1, 1), lambda p, i: (p, 0),
                               memory_space=pltpu.SMEM),
        scratch_shapes=[pltpu.VMEM((tile_n, 1), jnp.float32)],
        compiler_params=pltpu.CompilerParams(
            dimension_semantics=("parallel", "arbitrary"),
            vmem_limit_bytes=vmem_limit,
        ),
    )(*inputs)

    return jnp.sum(partials) / jnp.float32(n)


def _focal_loss_ref(logits, targets, gamma=2.0, alpha=None):
    """Pure-JAX reference mirroring the PyTorch forward."""
    logits = logits.astype(jnp.float32)
    lse = jax.nn.logsumexp(logits, axis=-1)
    ce = lse - jnp.take_along_axis(logits, targets[:, None], axis=-1)[:, 0]
    pt = jnp.exp(-ce)
    loss = (1.0 - pt) ** gamma * ce
    if alpha is not None:
        loss = jnp.asarray(alpha, jnp.float32)[targets] * loss
    return jnp.mean(loss)


if __name__ == "__main__":
    key = jax.random.PRNGKey(0)
    k1, k2, k3, k4, k5, k6 = jax.random.split(key, 6)

    C = 128  # lane-aligned class count

    # Case 1: small lane-aligned batch, no alpha (alpha path compiled out).
    N1 = 8
    logits1 = jax.random.normal(k1, (N1, C), dtype=jnp.float32)
    targets1 = jax.random.randint(k2, (N1,), 0, C, dtype=jnp.int32)
    out1 = jax.block_until_ready(focal_loss(logits1, targets1, gamma=2.0, alpha=None))
    ref1 = _focal_loss_ref(logits1, targets1, gamma=2.0, alpha=None)
    assert jnp.allclose(out1, ref1, rtol=1e-5, atol=1e-5), (out1, ref1)

    # Case 2: ragged batch (N not a multiple of the sublane tile) with per-class
    # alpha — exercises row masking and the pre-gathered alpha column.
    N2 = 10
    logits2 = jax.random.normal(k3, (N2, C), dtype=jnp.float32)
    targets2 = jax.random.randint(k4, (N2,), 0, C, dtype=jnp.int32)
    alpha = jax.random.uniform(k1, (C,), dtype=jnp.float32, minval=0.25, maxval=1.0)
    out2 = jax.block_until_ready(focal_loss(logits2, targets2, gamma=2.0, alpha=alpha))
    ref2 = _focal_loss_ref(logits2, targets2, gamma=2.0, alpha=alpha)
    assert jnp.allclose(out2, ref2, rtol=1e-5, atol=1e-5), (out2, ref2)

    # Case 3: forced multi-tile grid (tile_n=8 -> 5 tiles, 2 splits, one clamped
    # out-of-range step) — exercises the accumulator init/finalize, the 2-way
    # "parallel" split and the clamped index_map at a tiny size.
    N3 = 40
    logits3 = jax.random.normal(k5, (N3, C), dtype=jnp.float32)
    targets3 = jax.random.randint(k6, (N3,), 0, C, dtype=jnp.int32)
    out3 = jax.block_until_ready(
        focal_loss(logits3, targets3, gamma=2.0, alpha=alpha, max_tile_n=8))
    ref3 = _focal_loss_ref(logits3, targets3, gamma=2.0, alpha=alpha)
    assert jnp.allclose(out3, ref3, rtol=1e-5, atol=1e-5), (out3, ref3)

    print("KERNEL_OK")
</pallas_src>

<mosaic_0001>
module attributes {stable_mosaic.version = 11 : i64} {
  func.func @_focal_loss_kernel(%arg0: i32, %arg1: i32, %arg2: memref<8x128xf32, #tpu.memory_space<vmem>>, %arg3: memref<8x1xi32, #tpu.memory_space<vmem>>, %arg4: memref<1x1xf32, #tpu.memory_space<smem>>, %arg5: memref<8x1xf32, #tpu.memory_space<vmem>>) attributes {dimension_semantics = [#tpu.dimension_semantics<parallel>, #tpu.dimension_semantics<arbitrary>], iteration_bounds = array<i64: 1, 1>, scalar_prefetch = 0 : i64, scratch_operands = 1 : i64, tpu.core_type = #tpu.core_type<tc>, window_params = [{transform_indices = @transform_0, window_bounds = array<i64: 8, 128>}, {transform_indices = @transform_1, window_bounds = array<i64: 8, 1>}, {transform_indices = @transform_2, window_bounds = array<i64: 1, 1>}]} {
    %c0_i32 = arith.constant 0 : i32
    %0 = arith.cmpi eq, %arg1, %c0_i32 : i32
    %1 = arith.extui %0 : i1 to i32
    %c0_i32_0 = arith.constant 0 : i32
    %2 = arith.cmpi ne, %1, %c0_i32_0 : i32
    scf.if %2 {
      %cst_18 = arith.constant 0.000000e+00 : f32
      %47 = vector.broadcast %cst_18 : f32 to vector<8x1xf32>
      %c0_19 = arith.constant 0 : index
      %c0_20 = arith.constant 0 : index
      %48 = vector.load %arg5[%c0_19, %c0_20] : memref<8x1xf32, #tpu.memory_space<vmem>>, vector<8x1xf32>
      tpu.vector_store %arg5[%c0_19, %c0_20], %47 {strides = array<i32>} : memref<8x1xf32, #tpu.memory_space<vmem>>, vector<8x1xf32>,
    } else {
    }
    %c0 = arith.constant 0 : index
    %c0_1 = arith.constant 0 : index
    %3 = vector.load %arg2[%c0, %c0_1] : memref<8x128xf32, #tpu.memory_space<vmem>>, vector<8x128xf32>
    %c0_2 = arith.constant 0 : index
    %c0_3 = arith.constant 0 : index
    %4 = vector.load %arg3[%c0_2, %c0_3] : memref<8x1xi32, #tpu.memory_space<vmem>>, vector<8x1xi32>
    %5 = tpu.iota {dimensions = array<i32: 1>} : vector<8x128xi32>
    %6 = vector.broadcast %4 : vector<8x1xi32> to vector<8x128xi32>
    %7 = arith.cmpi eq, %5, %6 : vector<8x128xi32>
    %cst = arith.constant 0.000000e+00 : f32
    %8 = vector.broadcast %cst : f32 to vector<8x128xf32>
    %9 = arith.select %7, %3, %8 : vector<8x128xi1>, vector<8x128xf32>
    %cst_4 = arith.constant dense<0.000000e+00> : vector<8xf32>
    %10 = vector.multi_reduction <add>, %9, %cst_4 [1] : vector<8x128xf32> to vector<8xf32>
    %11 = vector.shape_cast %10 : vector<8xf32> to vector<8x1xf32>
    %cst_5 = arith.constant dense<0xFF800000> : vector<8xf32>
    %12 = vector.multi_reduction <maximumf>, %3, %cst_5 [1] : vector<8x128xf32> to vector<8xf32>
    %13 = vector.shape_cast %12 : vector<8xf32> to vector<8x1xf32>
    %14 = vector.broadcast %13 : vector<8x1xf32> to vector<8x128xf32>
    %15 = arith.subf %3, %14 : vector<8x128xf32>
    %16 = math.exp %15 : vector<8x128xf32>
    %cst_6 = arith.constant dense<0.000000e+00> : vector<8xf32>
    %17 = vector.multi_reduction <add>, %16, %cst_6 [1] : vector<8x128xf32> to vector<8xf32>
    %18 = vector.shape_cast %17 : vector<8xf32> to vector<8x1xf32>
    %19 = math.log %18 : vector<8x1xf32>
    %20 = arith.addf %13, %19 : vector<8x1xf32>
    %21 = arith.subf %20, %11 : vector<8x1xf32>
    %cst_7 = arith.constant 0.000000e+00 : f32
    %22 = vector.broadcast %cst_7 : f32 to vector<8x1xf32>
    %23 = arith.subf %22, %21 : vector<8x1xf32>
    %24 = math.exp %23 : vector<8x1xf32>
    %cst_8 = arith.constant 1.000000e+00 : f32
    %25 = vector.broadcast %cst_8 : f32 to vector<8x1xf32>
    %26 = arith.subf %25, %24 : vector<8x1xf32>
    %cst_9 = arith.constant 0.000000e+00 : f32
    %27 = vector.broadcast %cst_9 : f32 to vector<8x1xf32>
    %28 = arith.maximumf %26, %27 : vector<8x1xf32>
    %29 = arith.mulf %21, %28 : vector<8x1xf32>
    %30 = arith.mulf %29, %28 : vector<8x1xf32>
    %c1_i32 = arith.constant 1 : i32
    %31 = arith.muli %arg0, %c1_i32 : i32
    %32 = arith.addi %31, %arg1 : i32
    %c8_i32 = arith.constant 8 : i32
    %33 = arith.muli %32, %c8_i32 : i32
    %34 = tpu.iota {dimensions = array<i32: 0>} : vector<8x1xi32>
    %35 = vector.broadcast %33 : i32 to vector<8x1xi32>
    %36 = arith.addi %35, %34 : vector<8x1xi32>
    %c8_i32_10 = arith.constant 8 : i32
    %37 = vector.broadcast %c8_i32_10 : i32 to vector<8x1xi32>
    %38 = arith.cmpi slt, %36, %37 : vector<8x1xi32>
    %cst_11 = arith.constant 0.000000e+00 : f32
    %39 = vector.broadcast %cst_11 : f32 to vector<8x1xf32>
    %40 = arith.select %38, %30, %39 : vector<8x1xi1>, vector<8x1xf32>
    %c0_12 = arith.constant 0 : index
    %c0_13 = arith.constant 0 : index
    %41 = vector.load %arg5[%c0_12, %c0_13] : memref<8x1xf32, #tpu.memory_space<vmem>>, vector<8x1xf32>
    %42 = arith.addf %41, %40 : vector<8x1xf32>
    %c0_14 = arith.constant 0 : index
    %c0_15 = arith.constant 0 : index
    %43 = vector.load %arg5[%c0_14, %c0_15] : memref<8x1xf32, #tpu.memory_space<vmem>>, vector<8x1xf32>
    tpu.vector_store %arg5[%c0_14, %c0_15], %42 {strides = array<i32>} : memref<8x1xf32, #tpu.memory_space<vmem>>, vector<8x1xf32>,
    %c0_i32_16 = arith.constant 0 : i32
    %44 = arith.cmpi eq, %arg1, %c0_i32_16 : i32
    %45 = arith.extui %44 : i1 to i32
    %c0_i32_17 = arith.constant 0 : i32
    %46 = arith.cmpi ne, %45, %c0_i32_17 : i32
    scf.if %46 {
      %c0_18 = arith.constant 0 : index
      %c0_19 = arith.constant 0 : index
      %47 = vector.load %arg5[%c0_18, %c0_19] : memref<8x1xf32, #tpu.memory_space<vmem>>, vector<8x1xf32>
      %48 = vector.shape_cast %47 : vector<8x1xf32> to vector<1x8x1xf32>
      %cst_20 = arith.constant dense<0.000000e+00> : vector<1xf32>
      %49 = vector.multi_reduction <add>, %48, %cst_20 [1, 2] : vector<1x8x1xf32> to vector<1xf32>
      %50 = vector.shape_cast %49 : vector<1xf32> to vector<1x1x1xf32>
      %51 = vector.extract %50[0, 0, 0] : f32 from vector<1x1x1xf32>
      %c0_21 = arith.constant 0 : index
      %c0_22 = arith.constant 0 : index
      %52 = memref.load %arg4[%c0_21, %c0_22] : memref<1x1xf32, #tpu.memory_space<smem>>
      memref.store %51, %arg4[%c0_21, %c0_22] : memref<1x1xf32, #tpu.memory_space<smem>>
    } else {
    }
    return
  }
  func.func @transform_0(%arg0: i32, %arg1: i32) -> (i32, i32) {
    %c1_i32 = arith.constant 1 : i32
    %0 = arith.muli %arg0, %c1_i32 : i32
    %1 = arith.addi %0, %arg1 : i32
    %c0_i32 = arith.constant 0 : i32
    %2 = arith.minsi %1, %c0_i32 : i32
    %c0_i32_0 = arith.constant 0 : i32
    %c0_i32_1 = arith.constant 0 : i32
    return %2, %c0_i32_0 : i32, i32
  }
  func.func @transform_1(%arg0: i32, %arg1: i32) -> (i32, i32) {
    %c1_i32 = arith.constant 1 : i32
    %0 = arith.muli %arg0, %c1_i32 : i32
    %1 = arith.addi %0, %arg1 : i32
    %c0_i32 = arith.constant 0 : i32
    %2 = arith.minsi %1, %c0_i32 : i32
    %c0_i32_0 = arith.constant 0 : i32
    %c0_i32_1 = arith.constant 0 : i32
    return %2, %c0_i32_0 : i32, i32
  }
  func.func @transform_2(%arg0: i32, %arg1: i32) -> (i32, i32) {
    %c0_i32 = arith.constant 0 : i32
    %c0_i32_0 = arith.constant 0 : i32
    return %arg0, %c0_i32 : i32, i32
  }
}

</mosaic_0001>

<llo_original>
// kernel: tpu_custom_call.1
$region0: #{tpu_custom_call.1}
  #allocation0 [shape = 'u32[]', space=smem, size = 0x4, offset = 0x4, fixed_abs, tag = 'smem constant byte address 0x4 - core index']
  #allocation1 [shape = 'u32[144,128]{1,0:T(1,128)}', space=vmem, size = 0x12000, scoped, tag = 'internal scratch']
  #allocation2 [shape = 'f32[8,1]{1,0:T(8,128)}', space=vmem, size = 0x1000, scoped, tag = 'scratch operand']
  %s0 = inlined_call_operand.vmem [shape: f32[8,128], index: 0, kind: input, shape index: {}]
  %s1 = inlined_call_operand.vmem [shape: s32[8,1], index: 1, kind: input, shape index: {}]
  %s2 = inlined_call_operand.hbm [shape: f32[1,1], index: 2, kind: output, shape index: {}]
  %s3 = sld [smem:[#allocation0]]
  $region26: #{tpu_custom_call.1} parent=0
    _
  %s5 = ssub.s32 1, %s3
  %s6 = scalar_select 0, %s5, %s3
  $region1: #{tpu_custom_call.1} parent=0
    #allocation3 [shape = 'u8[512]{0}', space=smem, size = 0x200, scoped, tag = 'output window, operand 0, single buffered']
    #allocation4 [shape = 's32[1]{0}', space=sflag, size = 0x4, scoped, tag = 'scoped memory for tpu_custom_call.1']
    %7 = vsyncpa [#allocation4], 0
    // Predicated region
    $region2: #{tpu_custom_call.1} parent=1 // pred_check
      _
    $region3: #{tpu_custom_call.1} parent=1 // pred_check_branch
      %9 = sbr.rel (0) target = $region5
    $region4: #{tpu_custom_call.1} parent=1 // pred_region
      %s10 = sadd.s32 0, 0
      %p11 = scmp.lt.s32.totalorder %s10, 0
      %s12 = scalar_select %p11, %s10, 0
      %p13 = scmp.lt.s32.totalorder %s12, 0
      %s14 = scalar_select %p13, %s12, 0
      %s15 = smul.addr %s14, 8
      %s16 = scalar_lea.vmem %s0, %s15
      %s17 = sadd.s32 0, 0
      %p18 = scmp.lt.s32.totalorder %s17, 0
      %s19 = scalar_select %p18, %s17, 0
    $region5: #{tpu_custom_call.1} parent=1 // pred_fallthru
      _
    // Predicated region
    $region6: #{tpu_custom_call.1} parent=1 // pred_check
      _
    $region7: #{tpu_custom_call.1} parent=1 // pred_check_branch
      %21 = sbr.rel (0) target = $region9
    $region8: #{tpu_custom_call.1} parent=1 // pred_region
      %s22 = sadd.s32 0, 0
      %p23 = scmp.lt.s32.totalorder %s22, 0
      %s24 = scalar_select %p23, %s22, 0
      %p25 = scmp.lt.s32.totalorder %s24, 0
      %s26 = scalar_select %p25, %s24, 0
      %s27 = smul.addr %s26, 8
      %s28 = scalar_lea.vmem %s1, %s27
      %s29 = sadd.s32 0, 0
      %p30 = scmp.lt.s32.totalorder %s29, 0
      %s31 = scalar_select %p30, %s29, 0
    $region9: #{tpu_custom_call.1} parent=1 // pred_fallthru
      _
    %s32 = sadd.s32 0, 0
    %p33 = scmp.lt.s32.totalorder %s32, 0
    %s34 = scalar_select %p33, %s32, 0
    %p35 = scmp.lt.s32.totalorder %s34, 0
    %s36 = scalar_select %p35, %s34, 0
    %s37 = smul.addr %s36, 8
    %s38 = scalar_lea.vmem %s0, %s37
    %s39 = sadd.s32 0, 0
    %p40 = scmp.lt.s32.totalorder %s39, 0
    %s41 = scalar_select %p40, %s39, 0
    %p42 = scmp.lt.s32.totalorder %s41, 0
    %s43 = scalar_select %p42, %s41, 0
    %s44 = smul.addr %s43, 8
    %s45 = scalar_lea.vmem %s1, %s44
    %s46 = sadd.s32 0, 0
    %p47 = scmp.lt.s32.totalorder %s46, 0
    %s48 = scalar_select %p47, %s46, 0
    %p49 = scmp.lt.s32.totalorder %s48, 0
    %s50 = scalar_select %p49, %s48, 0
    %s51 = smul.addr %s50, 8
    %s52 = scalar_lea.vmem %s0, %s51
    %s53 = sadd.s32 0, 0
    %p54 = scmp.lt.s32.totalorder %s53, 0
    %s55 = scalar_select %p54, %s53, 0
    %s56 = sadd.s32 0, 0
    %p57 = scmp.lt.s32.totalorder %s56, 0
    %s58 = scalar_select %p57, %s56, 0
    %p59 = scmp.lt.s32.totalorder %s58, 0
    %s60 = scalar_select %p59, %s58, 0
    %s61 = smul.addr %s60, 8
    %s62 = scalar_lea.vmem %s1, %s61
    %s63 = sadd.s32 0, 0
    %p64 = scmp.lt.s32.totalorder %s63, 0
    %s65 = scalar_select %p64, %s63, 0
    %p66 = scmp.eq.s32.totalorder 0, 0
    // Predicated region
    $region10: #{tpu_custom_call.1} parent=1 // pred_check
      %p67 = pneg %p66
    $region11: #{tpu_custom_call.1} parent=1 // pred_check_branch
      %69 = sbr.rel (%p67) target = $region13
    $region12: #{tpu_custom_call.1} parent=1 // pred_region
      %vm70 = vcmask 7168
      %71 = vst.msk [vmem:[#allocation2] sm:$0xff] %vm70, 0.0
    $region13: #{tpu_custom_call.1} parent=1 // pred_fallthru
      _
    %v72 = vld [vmem:[%s52] sm:$0xff]
    %v73 = vld [vmem:[%s62] sm:$0xff]
    %v74 = vlaneseq
    %v75 = vand.u32 %v74, 127
    %76 = vset.pattern.permute.xlu0 0
    %77 = vperm.xlu0 %76, %v73
    %v78 = vpop.permute.xlu0 %77
    %vm79 = vcmp.eq.s32.totalorder %v75, %v78
    %v80 = vsel %vm79, %v72, 0.0
    %81 = vadd.xlane.f32.xlu0 %v80
    %v82 = vpop.xlane.xlu0 %81
    %83 = vmax.xlane.f32.xlu0 %v72
    %v84 = vpop.xlane.xlu0 %83
    %v85 = vsub.f32 %v72, %v84
    %v86 = vmul.f32 %v85, 1.442695
    %v87 = vpow.pop %v86
    %88 = vadd.xlane.f32.xlu0 %v87
    %v89 = vpop.xlane.xlu0 %88
    %v90 = vlog2.pop %v89
    %v91 = vmul.f32 %v90, 0.6931472
    %v92 = vadd.f32 %v84, %v91
    %v93 = vsub.f32 %v92, %v82
    %v94 = vsub.f32 0.0, %v93
    %v95 = vmul.f32 %v94, 1.442695
    %v96 = vpow.pop %v95
    %v97 = vsub.f32 1.0, %v96
    %v98 = vmax.f32 %v97, 0.0
    %v99 = vmul.f32 %v93, %v98
    %v100 = vmul.f32 %v99, %v98
    %s101 = sadd.s32 0, 0
    %s102 = smul.u32 %s101, 8
    %v103 = vlaneseq
    %v104 = vshrl.u32 %v103, 7
    %v105 = vstv %s102
    %v106 = vadd.s32 %v105, %v104
    %vm107 = vcmp.lt.s32.totalorder %v106, 8
    %v108 = vsel %vm107, %v100, 0.0
    %v109 = vld [vmem:[#allocation2] sm:$0xff]
    %v110 = vadd.f32 %v109, %v108
    %vm111 = vcmask 7168
    %112 = vst.msk [vmem:[#allocation2] sm:$0xff] %vm111, %v110
    // Predicated region
    $region14: #{tpu_custom_call.1} parent=1 // pred_check
      %p113 = pneg %p66
    $region15: #{tpu_custom_call.1} parent=1 // pred_check_branch
      %115 = sbr.rel (%p113) target = $region17
    $region16: #{tpu_custom_call.1} parent=1 // pred_region
      %v116 = vld [vmem:[#allocation2] sm:$0xff]
      %v117 = vsel %vm111, %v116, 0.0
      %118 = vadd.xlane.f32.xlu0 %v117
      %v119 = vpop.xlane.xlu0 %118
      %v120 = vrot.slane %v119, 4
      %v121 = vadd.f32 %v119, %v120
      %v122 = vrot.slane %v121, 2
      %v123 = vadd.f32 %v121, %v122
      %v124 = vrot.slane %v123, 1
      %v125 = vadd.f32 %v123, %v124
      %s126 = vtos %v125
      %s127 = scalar_lea.smem [#allocation3], 0
      %128 = sst [smem:[%s127]] %s126
    $region17: #{tpu_custom_call.1} parent=1 // pred_fallthru
      _
    // Predicated region
    $region18: #{tpu_custom_call.1} parent=1 // pred_check
      _
    $region19: #{tpu_custom_call.1} parent=1 // pred_check_branch
      %130 = sbr.rel (0) target = $region21
    $region20: #{tpu_custom_call.1} parent=1 // pred_region
      %s132 = ssub.s32 16, 16
      %133 = vsyncadd [#allocation4], %s132
      %136 = dma.smem_to_hbm [#allocation3], 16, %s2, [#allocation4]
    $region21: #{tpu_custom_call.1} parent=1 // pred_fallthru
      _
    // Predicated region
    $region22: #{tpu_custom_call.1} parent=1 // pred_check
      _
    $region23: #{tpu_custom_call.1} parent=1 // pred_check_branch
      %138 = sbr.rel (0) target = $region25
    $region24: #{tpu_custom_call.1} parent=1 // pred_region
      %139 = dma.done [#allocation4], 16
    $region25: #{tpu_custom_call.1} parent=1 // pred_fallthru
      _
    %140 = sfence
    %141 = vsyncpa [#allocation4], 1

</llo_original>
